<compile_context>
chip_gen: v5e
topology: v5e:2x2
jax: 0.10.0
libtpu: 0.0.40
codegen_flags: <defaults>
</compile_context>

<pallas_src>
import functools

import jax
import jax.numpy as jnp
from jax.experimental import pallas as pl
from jax.experimental.pallas import tpu as pltpu

EPS = 1e-8


def guidance_kernel(guide_ref, x_ref, w_ref, b_ref, out_ref, *, key_block):
    # guide_ref: (TB, 1, D) VMEM   x_ref: (TB, N, D) VMEM
    # w_ref:     (1, D)     VMEM   b_ref: (1, 1)     SMEM
    # out_ref:   (TB, 1, D) VMEM
    x = x_ref[...].astype(jnp.float32)        # (TB, N, D)
    g = guide_ref[...].astype(jnp.float32)    # (TB, 1, D)
    w = w_ref[...].astype(jnp.float32)        # (1, D)
    b = b_ref[0, 0]                           # scalar (SMEM read)

    tb, n, d = x.shape

    # --- l2-normalize along the feature dim ---
    inv_nrm = 1.0 / (jnp.sqrt(jnp.sum(x * x, axis=-1, keepdims=True)) + EPS)
    xn = x * inv_nrm                                                  # (TB, N, D)

    # --- redundancy, streamed over key blocks (only (TB,N,TK) live at once) ---
    # einsum contracts D on both operands -> MXU "transposed rhs", no XLU pass.
    red = jnp.zeros((tb, n, 1), dtype=jnp.float32)
    num_kb = n // key_block
    for kb in range(num_kb):  # static unroll; single iteration when N <= key_block
        xk = xn[:, kb * key_block:(kb + 1) * key_block, :]            # (TB, TK, D)
        sim = jnp.einsum("bnd,bkd->bnk", xn, xk,
                         preferred_element_type=jnp.float32)          # (TB, N, TK)
        red = red + jnp.sum(jnp.maximum(sim, 0.0), axis=-1, keepdims=True)

    # --- cross-attention logits: fold guide into the Linear weight ---
    c = g * w                                                         # (TB, 1, D)
    attn = jnp.sum(x * c, axis=-1, keepdims=True) + b                 # (TB, N, 1)

    # --- relu, divide by redundancy, l1-normalize over the sequence dim ---
    attn = jnp.maximum(attn, 0.0) / red
    attn = attn / (jnp.sum(attn, axis=1, keepdims=True) + EPS)        # attn >= 0

    # --- weighted aggregation over N as an MXU contraction, plus residual ---
    agg = jnp.einsum("bnk,bnd->bkd", attn, x,
                     preferred_element_type=jnp.float32)              # (TB, 1, D)
    out_ref[...] = (agg + g).astype(out_ref.dtype)


def _largest_divisor_leq(n, cap):
    cap = max(1, min(n, cap))
    for t in range(cap, 0, -1):
        if n % t == 0:
            return t
    return 1


def guidance_forward(guide_features, all_features, w, bias,
                     *, max_tb=32, max_key_block=256):
    """guide_features: (B,1,D), all_features: (B,N,D), w: (1,D), bias: (1,1)."""
    B, N, D = all_features.shape

    # Key-block width for streaming the redundancy matmul (divides N).
    tk = _largest_divisor_leq(N, max_key_block)

    # Batch items per grid step: amortize per-step overhead, bounded by a VMEM
    # budget for the f32 working set of one step.
    vmem_budget = 8 * 1024 * 1024
    per_item_bytes = (3 * N * D + N * tk + 4 * N + 4 * D) * 4
    tb_cap = max(1, min(max_tb, vmem_budget // max(per_item_bytes, 1)))
    TB = _largest_divisor_leq(B, tb_cap)

    kernel = functools.partial(guidance_kernel, key_block=tk)
    bias2d = jnp.asarray(bias, dtype=jnp.float32).reshape(1, 1)

    return pl.pallas_call(
        kernel,
        out_shape=jax.ShapeDtypeStruct((B, 1, D), jnp.float32),
        grid_spec=pltpu.PrefetchScalarGridSpec(
            num_scalar_prefetch=0,
            grid=(B // TB,),
            in_specs=[
                pl.BlockSpec((TB, 1, D), lambda i: (i, 0, 0)),     # guide
                pl.BlockSpec((TB, N, D), lambda i: (i, 0, 0)),     # all_features
                pl.BlockSpec((1, D), lambda i: (0, 0)),            # fc_attn weight
                pl.BlockSpec(memory_space=pltpu.MemorySpace.SMEM),  # fc_attn bias
            ],
            out_specs=pl.BlockSpec((TB, 1, D), lambda i: (i, 0, 0)),
        ),
        compiler_params=pltpu.CompilerParams(
            dimension_semantics=("parallel",),
            vmem_limit_bytes=48 * 1024 * 1024,
        ),
    )(guide_features, all_features, w, bias2d)


def guidance_reference(guide_features, all_features, w, bias):
    """Pure-JAX reference mirroring the PyTorch module."""
    x = all_features.astype(jnp.float32)
    g = guide_features.astype(jnp.float32)
    xn = x / (jnp.sqrt(jnp.sum(x * x, axis=-1, keepdims=True)) + EPS)
    sim = jnp.einsum("bnd,bmd->bnm", xn, xn)
    red = jnp.sum(jnp.maximum(sim, 0.0), axis=-1, keepdims=True)
    attn = jnp.einsum("bnd,od->bno", x * g, w) + bias[0, 0]
    attn = jnp.maximum(attn, 0.0) / red
    attn = attn / (jnp.sum(jnp.abs(attn), axis=1, keepdims=True) + EPS)
    agg = jnp.sum(attn * x, axis=1, keepdims=True)
    return agg + g


if __name__ == "__main__":
    B, N, D = 2, 8, 32            # batch, seq (all_features), hidden_dim
    input_dim = 16                # unused by the module's forward (as in PyTorch)

    key = jax.random.PRNGKey(0)
    k_all, k_guide, k_w, k_b = jax.random.split(key, 4)

    all_features = jax.random.normal(k_all, (B, N, D), dtype=jnp.float32)
    guide_features = jax.random.normal(k_guide, (B, 1, D), dtype=jnp.float32)

    # fc_attn = nn.Linear(hidden_dim, 1): weight (1, D), bias (1,)
    bound = 1.0 / (D ** 0.5)
    w = jax.random.uniform(k_w, (1, D), dtype=jnp.float32, minval=-bound, maxval=bound)
    bias = jax.random.uniform(k_b, (1, 1), dtype=jnp.float32, minval=-bound, maxval=bound)

    out = guidance_forward(guide_features, all_features, w, bias)
    out = jax.block_until_ready(out)

    ref = guidance_reference(guide_features, all_features, w, bias)
    assert out.shape == (B, 1, D)
    assert jnp.allclose(out, ref, rtol=1e-5, atol=1e-5), "mismatch vs reference"

    print("KERNEL_OK")
</pallas_src>

<mosaic_0001>
module attributes {stable_mosaic.version = 11 : i64} {
  func.func @guidance_kernel(%arg0: i32, %arg1: memref<2x1x32xf32, #tpu.memory_space<vmem>>, %arg2: memref<2x8x32xf32, #tpu.memory_space<vmem>>, %arg3: memref<1x32xf32, #tpu.memory_space<vmem>>, %arg4: memref<1x1xf32, #tpu.memory_space<smem>>, %arg5: memref<2x1x32xf32, #tpu.memory_space<vmem>>) attributes {dimension_semantics = [#tpu.dimension_semantics<parallel>], iteration_bounds = array<i64: 1>, scalar_prefetch = 0 : i64, scratch_operands = 0 : i64, tpu.core_type = #tpu.core_type<tc>, window_params = [{transform_indices = @transform_0, window_bounds = array<i64: 2, 1, 32>}, {transform_indices = @transform_1, window_bounds = array<i64: 2, 8, 32>}, {pipeline_mode = #tpu.pipeline_mode<synchronous>, transform_indices = @transform_2, window_bounds = array<i64: 1, 32>}, {transform_indices = @transform_3, window_bounds = array<i64: 1, 1>}, {transform_indices = @transform_4, window_bounds = array<i64: 2, 1, 32>}]} {
    %c0 = arith.constant 0 : index
    %c0_0 = arith.constant 0 : index
    %c0_1 = arith.constant 0 : index
    %0 = vector.load %arg2[%c0, %c0_0, %c0_1] : memref<2x8x32xf32, #tpu.memory_space<vmem>>, vector<2x8x32xf32>
    %c0_2 = arith.constant 0 : index
    %c0_3 = arith.constant 0 : index
    %c0_4 = arith.constant 0 : index
    %1 = vector.load %arg1[%c0_2, %c0_3, %c0_4] : memref<2x1x32xf32, #tpu.memory_space<vmem>>, vector<2x1x32xf32>
    %c0_5 = arith.constant 0 : index
    %c0_6 = arith.constant 0 : index
    %2 = vector.load %arg3[%c0_5, %c0_6] : memref<1x32xf32, #tpu.memory_space<vmem>>, vector<1x32xf32>
    %c0_7 = arith.constant 0 : index
    %c0_8 = arith.constant 0 : index
    %3 = memref.load %arg4[%c0_7, %c0_8] : memref<1x1xf32, #tpu.memory_space<smem>>
    %4 = arith.mulf %0, %0 : vector<2x8x32xf32>
    %cst = arith.constant dense<0.000000e+00> : vector<2x8xf32>
    %5 = vector.multi_reduction <add>, %4, %cst [2] : vector<2x8x32xf32> to vector<2x8xf32>
    %6 = vector.shape_cast %5 : vector<2x8xf32> to vector<2x8x1xf32>
    %7 = math.sqrt %6 : vector<2x8x1xf32>
    %cst_9 = arith.constant 9.99999993E-9 : f32
    %8 = vector.broadcast %cst_9 : f32 to vector<2x8x1xf32>
    %9 = arith.addf %7, %8 : vector<2x8x1xf32>
    %cst_10 = arith.constant 1.000000e+00 : f32
    %10 = vector.broadcast %cst_10 : f32 to vector<2x8x1xf32>
    %11 = arith.divf %10, %9 : vector<2x8x1xf32>
    %12 = vector.broadcast %11 : vector<2x8x1xf32> to vector<2x8x32xf32>
    %13 = arith.mulf %0, %12 : vector<2x8x32xf32>
    %cst_11 = arith.constant 0.000000e+00 : f32
    %14 = vector.broadcast %cst_11 : f32 to vector<2x8x1xf32>
    "tpu.trace_start"() <{level = 10 : i32, message = "bnd,bkd->bnk"}> : () -> ()
    %cst_12 = arith.constant dense<0.000000e+00> : vector<2x8x8xf32>
    %15 = tpu.matmul %13, %13, %cst_12 {dimension_numbers = #tpu.dot_dimension_numbers<[2], [2], [1], [1], [0, 0, 0, 1, 1, 1], [0], [0]>} : vector<2x8x32xf32>, vector<2x8x32xf32>, vector<2x8x8xf32> -> vector<2x8x8xf32>
    "tpu.trace_stop"() : () -> ()
    %cst_13 = arith.constant 0.000000e+00 : f32
    %16 = vector.broadcast %cst_13 : f32 to vector<2x8x8xf32>
    %17 = arith.maximumf %15, %16 : vector<2x8x8xf32>
    %cst_14 = arith.constant dense<0.000000e+00> : vector<2x8xf32>
    %18 = vector.multi_reduction <add>, %17, %cst_14 [2] : vector<2x8x8xf32> to vector<2x8xf32>
    %19 = vector.shape_cast %18 : vector<2x8xf32> to vector<2x8x1xf32>
    %20 = arith.addf %14, %19 : vector<2x8x1xf32>
    %21 = vector.shape_cast %2 : vector<1x32xf32> to vector<1x1x32xf32>
    %22 = vector.broadcast %21 : vector<1x1x32xf32> to vector<2x1x32xf32>
    %23 = arith.mulf %1, %22 : vector<2x1x32xf32>
    %24 = vector.broadcast %23 : vector<2x1x32xf32> to vector<2x8x32xf32>
    %25 = arith.mulf %0, %24 : vector<2x8x32xf32>
    %cst_15 = arith.constant dense<0.000000e+00> : vector<2x8xf32>
    %26 = vector.multi_reduction <add>, %25, %cst_15 [2] : vector<2x8x32xf32> to vector<2x8xf32>
    %27 = vector.shape_cast %26 : vector<2x8xf32> to vector<2x8x1xf32>
    %28 = vector.broadcast %3 : f32 to vector<2x8x1xf32>
    %29 = arith.addf %27, %28 : vector<2x8x1xf32>
    %cst_16 = arith.constant 0.000000e+00 : f32
    %30 = vector.broadcast %cst_16 : f32 to vector<2x8x1xf32>
    %31 = arith.maximumf %29, %30 : vector<2x8x1xf32>
    %32 = arith.divf %31, %20 : vector<2x8x1xf32>
    %cst_17 = arith.constant dense<0.000000e+00> : vector<2x1xf32>
    %33 = vector.multi_reduction <add>, %32, %cst_17 [1] : vector<2x8x1xf32> to vector<2x1xf32>
    %34 = vector.shape_cast %33 : vector<2x1xf32> to vector<2x1x1xf32>
    %cst_18 = arith.constant 9.99999993E-9 : f32
    %35 = vector.broadcast %cst_18 : f32 to vector<2x1x1xf32>
    %36 = arith.addf %34, %35 : vector<2x1x1xf32>
    %37 = vector.broadcast %36 : vector<2x1x1xf32> to vector<2x8x1xf32>
    %38 = arith.divf %32, %37 : vector<2x8x1xf32>
    "tpu.trace_start"() <{level = 10 : i32, message = "bnk,bnd->bkd"}> : () -> ()
    %cst_19 = arith.constant dense<0.000000e+00> : vector<2x1x32xf32>
    %39 = tpu.matmul %38, %0, %cst_19 {dimension_numbers = #tpu.dot_dimension_numbers<[1], [1], [2], [2], [0, 0, 0, 2, 1, 2], [0], [0]>} : vector<2x8x1xf32>, vector<2x8x32xf32>, vector<2x1x32xf32> -> vector<2x1x32xf32>
    "tpu.trace_stop"() : () -> ()
    %40 = arith.addf %39, %1 : vector<2x1x32xf32>
    %c0_20 = arith.constant 0 : index
    %c0_21 = arith.constant 0 : index
    %c0_22 = arith.constant 0 : index
    %41 = vector.load %arg5[%c0_20, %c0_21, %c0_22] : memref<2x1x32xf32, #tpu.memory_space<vmem>>, vector<2x1x32xf32>
    tpu.vector_store %arg5[%c0_20, %c0_21, %c0_22], %40 {strides = array<i32>} : memref<2x1x32xf32, #tpu.memory_space<vmem>>, vector<2x1x32xf32>,
    return
  }
  func.func @transform_0(%arg0: i32) -> (i32, i32, i32) {
    %c0_i32 = arith.constant 0 : i32
    %c0_i32_0 = arith.constant 0 : i32
    %c0_i32_1 = arith.constant 0 : i32
    return %arg0, %c0_i32, %c0_i32_0 : i32, i32, i32
  }
  func.func @transform_1(%arg0: i32) -> (i32, i32, i32) {
    %c0_i32 = arith.constant 0 : i32
    %c0_i32_0 = arith.constant 0 : i32
    %c0_i32_1 = arith.constant 0 : i32
    return %arg0, %c0_i32, %c0_i32_0 : i32, i32, i32
  }
  func.func @transform_2(%arg0: i32) -> (i32, i32) {
    %c0_i32 = arith.constant 0 : i32
    %c0_i32_0 = arith.constant 0 : i32
    %c0_i32_1 = arith.constant 0 : i32
    return %c0_i32, %c0_i32_0 : i32, i32
  }
  func.func @transform_3(%arg0: i32) -> (i32, i32) {
    %c0_i32 = arith.constant 0 : i32
    %c0_i32_0 = arith.constant 0 : i32
    %c0_i32_1 = arith.constant 0 : i32
    return %c0_i32, %c0_i32_0 : i32, i32
  }
  func.func @transform_4(%arg0: i32) -> (i32, i32, i32) {
    %c0_i32 = arith.constant 0 : i32
    %c0_i32_0 = arith.constant 0 : i32
    %c0_i32_1 = arith.constant 0 : i32
    return %arg0, %c0_i32, %c0_i32_0 : i32, i32, i32
  }
}

</mosaic_0001>

<llo_original>
// kernel: tpu_custom_call.1
$region0: #{tpu_custom_call.1}
  #allocation0 [shape = 'u32[]', space=smem, size = 0x4, offset = 0x4, fixed_abs, tag = 'smem constant byte address 0x4 - core index']
  #allocation1 [shape = 'u32[72,128]{1,0:T(1,128)}', space=vmem, size = 0x9000, scoped, tag = 'internal scratch']
  #allocation2 [shape = 'f32[1,1]{1,0:T(1,128)S(6)}', space=smem, size = 0x200, scoped, tag = 'scoped memory for tpu_custom_call.1']
  %s0 = inlined_call_operand.vmem [shape: f32[2,1,32], index: 0, kind: input, shape index: {}]
  %s1 = inlined_call_operand.hbm [shape: f32[2,8,32], index: 1, kind: input, shape index: {}]
  %s2 = inlined_call_operand.vmem [shape: f32[1,32], index: 2, kind: input, shape index: {}]
  %s3 = inlined_call_operand.<no memory space> [shape: f32[1,1], index: 3, kind: input, shape index: {}]
  %s4 = inlined_call_operand.hbm [shape: f32[2,1,32], index: 4, kind: output, shape index: {}]
  %s5 = sld [smem:[#allocation0]]
  $region30: #{tpu_custom_call.1} parent=0
    _
  %s7 = ssub.s32 1, %s5
  %s8 = scalar_select 0, %s7, %s5
  %9 = sst [smem:[#allocation2]] %s3
  $region1: #{tpu_custom_call.1} parent=0
    #allocation3 [shape = 'u8[8192]{0}', space=vmem, size = 0x2000, scoped, tag = 'input window, operand 1, single buffered']
    #allocation4 [shape = 's32[1]{0}', space=sflag, size = 0x4, scoped, tag = 'scoped memory for tpu_custom_call.1']
    #allocation5 [shape = 's32[1]{0}', space=sflag, size = 0x4, scoped, tag = 'scoped memory for tpu_custom_call.1']
    #allocation6 [shape = 'u8[1024]{0}', space=vmem, size = 0x400, scoped, tag = 'output window, operand 0, single buffered']
    %10 = vsyncpa [#allocation4], 0
    %11 = vsyncpa [#allocation5], 0
    // Predicated region
    $region2: #{tpu_custom_call.1} parent=1 // pred_check
      _
    $region3: #{tpu_custom_call.1} parent=1 // pred_check_branch
      %13 = sbr.rel (0) target = $region5
    $region4: #{tpu_custom_call.1} parent=1 // pred_region
      _
    $region5: #{tpu_custom_call.1} parent=1 // pred_fallthru
      _
    // Predicated region
    $region6: #{tpu_custom_call.1} parent=1 // pred_check
      _
    $region7: #{tpu_custom_call.1} parent=1 // pred_check_branch
      %15 = sbr.rel (0) target = $region9
    $region8: #{tpu_custom_call.1} parent=1 // pred_region
      %17 = vsyncadd [#allocation4], 0
      %s18 = sshll.u32 %s1, 4
      %s19 = int_to_ptr.hbm [resolvable:$true] %s18
      %s20 = sshll.u32 [#allocation3], 4
      %s21 = int_to_ptr.vmem [resolvable:$true] %s20
      %26 = dma.hbm_to_vmem [thread:$0]  %s19, 256, %s21, [#allocation4], 128, 128, 8
    $region9: #{tpu_custom_call.1} parent=1 // pred_fallthru
      _
    // Predicated region
    $region10: #{tpu_custom_call.1} parent=1 // pred_check
      _
    $region11: #{tpu_custom_call.1} parent=1 // pred_check_branch
      %28 = sbr.rel (0) target = $region13
    $region12: #{tpu_custom_call.1} parent=1 // pred_region
      _
    $region13: #{tpu_custom_call.1} parent=1 // pred_fallthru
      _
    // Predicated region
    $region14: #{tpu_custom_call.1} parent=1 // pred_check
      _
    $region15: #{tpu_custom_call.1} parent=1 // pred_check_branch
      %30 = sbr.rel (0) target = $region17
    $region16: #{tpu_custom_call.1} parent=1 // pred_region
      _
    $region17: #{tpu_custom_call.1} parent=1 // pred_fallthru
      _
    // Predicated region
    $region18: #{tpu_custom_call.1} parent=1 // pred_check
      _
    $region19: #{tpu_custom_call.1} parent=1 // pred_check_branch
      %32 = sbr.rel (0) target = $region21
    $region20: #{tpu_custom_call.1} parent=1 // pred_region
      %34 = dma.done [#allocation4], 256
    $region21: #{tpu_custom_call.1} parent=1 // pred_fallthru
      _
    %v35 = vld [vmem:[#allocation3] sm:$0xff]
    %v36 = vld [vmem:[#allocation3 + $0x8] sm:$0xff]
    %v37 = vld [vmem:[%s0] sm:$0x1]
    %v38 = vld [vmem:[%s0 + $0x1] sm:$0x1]
    %v39 = vld [vmem:[%s2] sm:$0x1]
    %s40 = sld [smem:[#allocation2]]
    %v41 = vmul.f32 %v35, %v35
    %v42 = vmul.f32 %v36, %v36
    %vm43 = vcmask 261120
    %v44 = vsel %vm43, %v41, 0.0
    %45 = vadd.xlane.f32.xlu0 %v44
    %v46 = vpop.xlane.xlu0 %45
    %v47 = vsel %vm43, %v42, 0.0
    %48 = vadd.xlane.f32.xlu0 %v47
    %v49 = vpop.xlane.xlu0 %48
    %v50 = vrsqrt.pop %v46
    %v51 = vmul.f32 %v50, %v46
    %v52 = vmul.f32 %v51, %v50
    %v53 = vmul.f32 0.5, %v52
    %v54 = vsub.f32 1.5, %v53
    %v55 = vmul.f32 %v50, %v54
    %v56 = vmul.f32 %v46, %v55
    %vm57 = vcmp.eq.f32.partialorder %v46, inf
    %v58 = vsel %vm57, %v46, %v56
    %vm59 = vcmp.eq.f32.partialorder %v46, 0.0
    %v60 = vand.u32 %v46, 2147483648
    %v61 = vsel %vm59, %v60, %v58
    %v62 = vrsqrt.pop %v49
    %v63 = vmul.f32 %v62, %v49
    %v64 = vmul.f32 %v63, %v62
    %v65 = vmul.f32 0.5, %v64
    %v66 = vsub.f32 1.5, %v65
    %v67 = vmul.f32 %v62, %v66
    %v68 = vmul.f32 %v49, %v67
    %vm69 = vcmp.eq.f32.partialorder %v49, inf
    %v70 = vsel %vm69, %v49, %v68
    %vm71 = vcmp.eq.f32.partialorder %v49, 0.0
    %v72 = vand.u32 %v49, 2147483648
    %v73 = vsel %vm71, %v72, %v70
    %v74 = vadd.f32 %v61, 1e-08
    %v75 = vadd.f32 %v73, 1e-08
    %v76 = vrcp.pop %v74
    %v77 = vmul.f32 %v74, %v76
    %v78 = vsub.f32 1.0, %v77
    %v79 = vmul.f32 %v76, %v78
    %v80 = vadd.f32 %v76, %v79
    %vm81 = vweird.f32 %v74
    %vm82 = vweird.f32 %v76
    %vm83 = vmor %vm81, %vm82
    %v84 = vsel %vm83, %v76, %v80
    %v85 = vand.u32 2147483647, %v74
    %vm86 = vcmp.eq.f32.partialorder %v85, 8.507059e+37
    %v87 = vand.u32 %v74, 2147483648
    %v88 = vor.u32 1.1754944e-38, %v87
    %v89 = vsel %vm86, %v88, %v84
    %v90 = vmul.f32 1.0, %v89
    %v91 = vrcp.pop %v75
    %v92 = vmul.f32 %v75, %v91
    %v93 = vsub.f32 1.0, %v92
    %v94 = vmul.f32 %v91, %v93
    %v95 = vadd.f32 %v91, %v94
    %vm96 = vweird.f32 %v75
    %vm97 = vweird.f32 %v91
    %vm98 = vmor %vm96, %vm97
    %v99 = vsel %vm98, %v91, %v95
    %v100 = vand.u32 2147483647, %v75
    %vm101 = vcmp.eq.f32.partialorder %v100, 8.507059e+37
    %v102 = vand.u32 %v75, 2147483648
    %v103 = vor.u32 1.1754944e-38, %v102
    %v104 = vsel %vm101, %v103, %v99
    %v105 = vmul.f32 1.0, %v104
    %v106 = vmul.f32 %v35, %v90
    %v107 = vmul.f32 %v36, %v105
    %v109 = vsel %vm43, %v106, 0
    %111 = vmatpush.xpose.msra.mxu0 0.0
    %112 = vmatpush.xpose.msra.mxu0 0.0
    %113 = vmatpush.xpose.msra.mxu0 0.0
    %114 = vmatpush.xpose.msra.mxu0 0.0
    %115 = vmatpush.xpose.msra.mxu0 0.0
    %116 = vmatpush.xpose.msra.mxu0 0.0
    %117 = vmatpush.xpose.msra.mxu0 0.0
    %118 = vmatpush.xpose.msra.mxu0 0.0
    %119 = vmatpush.xpose.msra.mxu0 0.0
    %120 = vmatpush.xpose.msra.mxu0 0.0
    %121 = vmatpush.xpose.msra.mxu0 0.0
    %122 = vmatpush.xpose.msra.mxu0 0.0
    %123 = vmatpush.xpose.msra.mxu0 0.0
    %124 = vmatpush.xpose.msra.mxu0 0.0
    %125 = vmatpush.xpose.msra.mxu0 0.0
    %126 = vmatpush.xpose.msra.mxu0 %v109
    %127 = vmatmul.f32.gmra.mxu0 %v109
    %v128 = vpop.f32.mrf.mxu0
    %v129 = vadd.f32 0.0, %v128
    %130 = vdwg.mxu0
    %v132 = vsel %vm43, %v107, 0
    %134 = vmatpush.xpose.msra.mxu0 0.0
    %135 = vmatpush.xpose.msra.mxu0 0.0
    %136 = vmatpush.xpose.msra.mxu0 0.0
    %137 = vmatpush.xpose.msra.mxu0 0.0
    %138 = vmatpush.xpose.msra.mxu0 0.0
    %139 = vmatpush.xpose.msra.mxu0 0.0
    %140 = vmatpush.xpose.msra.mxu0 0.0
    %141 = vmatpush.xpose.msra.mxu0 0.0
    %142 = vmatpush.xpose.msra.mxu0 0.0
    %143 = vmatpush.xpose.msra.mxu0 0.0
    %144 = vmatpush.xpose.msra.mxu0 0.0
    %145 = vmatpush.xpose.msra.mxu0 0.0
    %146 = vmatpush.xpose.msra.mxu0 0.0
    %147 = vmatpush.xpose.msra.mxu0 0.0
    %148 = vmatpush.xpose.msra.mxu0 0.0
    %149 = vmatpush.xpose.msra.mxu0 %v132
    %150 = vmatmul.f32.gmra.mxu0 %v132
    %v151 = vpop.f32.mrf.mxu0
    %v152 = vadd.f32 0.0, %v151
    %153 = vdwg.mxu0
    %v154 = vmax.f32 %v129, 0.0
    %v155 = vmax.f32 %v152, 0.0
    %vm156 = vcmask 64512
    %v157 = vsel %vm156, %v154, 0.0
    %158 = vadd.xlane.f32.xlu0 %v157
    %v159 = vpop.xlane.xlu0 %158
    %v160 = vsel %vm156, %v155, 0.0
    %161 = vadd.xlane.f32.xlu0 %v160
    %v162 = vpop.xlane.xlu0 %161
    %v163 = vadd.f32 %v159, 0.0
    %v164 = vadd.f32 %v162, 0.0
    %v165 = vmul.f32 %v37, %v39
    %v166 = vmul.f32 %v38, %v39
    %v169 = vperm.slane %v165, 0
    %v170 = vperm.slane %v166, 0
    %v173 = vmul.f32 %v35, %v169
    %v174 = vmul.f32 %v36, %v170
    %v175 = vsel %vm43, %v173, 0.0
    %176 = vadd.xlane.f32.xlu0 %v175
    %v177 = vpop.xlane.xlu0 %176
    %v178 = vsel %vm43, %v174, 0.0
    %179 = vadd.xlane.f32.xlu0 %v178
    %v180 = vpop.xlane.xlu0 %179
    %v181 = vstv %s40
    %v182 = vadd.f32 %v177, %v181
    %v183 = vadd.f32 %v180, %v181
    %v184 = vmax.f32 %v182, 0.0
    %v185 = vmax.f32 %v183, 0.0
    %v186 = vrcp.pop %v163
    %v187 = vmul.f32 %v163, %v186
    %v188 = vsub.f32 1.0, %v187
    %v189 = vmul.f32 %v186, %v188
    %v190 = vadd.f32 %v186, %v189
    %vm191 = vweird.f32 %v163
    %vm192 = vweird.f32 %v186
    %vm193 = vmor %vm191, %vm192
    %v194 = vsel %vm193, %v186, %v190
    %v195 = vand.u32 2147483647, %v163
    %vm196 = vcmp.eq.f32.partialorder %v195, 8.507059e+37
    %v197 = vand.u32 %v163, 2147483648
    %v198 = vor.u32 1.1754944e-38, %v197
    %v199 = vsel %vm196, %v198, %v194
    %v200 = vmul.f32 %v184, %v199
    %v201 = vrcp.pop %v164
    %v202 = vmul.f32 %v164, %v201
    %v203 = vsub.f32 1.0, %v202
    %v204 = vmul.f32 %v201, %v203
    %v205 = vadd.f32 %v201, %v204
    %vm206 = vweird.f32 %v164
    %vm207 = vweird.f32 %v201
    %vm208 = vmor %vm206, %vm207
    %v209 = vsel %vm208, %v201, %v205
    %v210 = vand.u32 2147483647, %v164
    %vm211 = vcmp.eq.f32.partialorder %v210, 8.507059e+37
    %v212 = vand.u32 %v164, 2147483648
    %v213 = vor.u32 1.1754944e-38, %v212
    %v214 = vsel %vm211, %v213, %v209
    %v215 = vmul.f32 %v185, %v214
    %v216 = vrot.slane %v200, 4
    %v217 = vadd.f32 %v200, %v216
    %v218 = vrot.slane %v217, 2
    %v219 = vadd.f32 %v217, %v218
    %v220 = vrot.slane %v219, 1
    %v221 = vadd.f32 %v219, %v220
    %v222 = vrot.slane %v215, 4
    %v223 = vadd.f32 %v215, %v222
    %v224 = vrot.slane %v223, 2
    %v225 = vadd.f32 %v223, %v224
    %v226 = vrot.slane %v225, 1
    %v227 = vadd.f32 %v225, %v226
    %v228 = vadd.f32 %v221, 1e-08
    %v229 = vadd.f32 %v227, 1e-08
    %v230 = vrcp.pop %v228
    %v231 = vmul.f32 %v228, %v230
    %v232 = vsub.f32 1.0, %v231
    %v233 = vmul.f32 %v230, %v232
    %v234 = vadd.f32 %v230, %v233
    %vm235 = vweird.f32 %v228
    %vm236 = vweird.f32 %v230
    %vm237 = vmor %vm235, %vm236
    %v238 = vsel %vm237, %v230, %v234
    %v239 = vand.u32 2147483647, %v228
    %vm240 = vcmp.eq.f32.partialorder %v239, 8.507059e+37
    %v241 = vand.u32 %v228, 2147483648
    %v242 = vor.u32 1.1754944e-38, %v241
    %v243 = vsel %vm240, %v242, %v238
    %v244 = vmul.f32 %v200, %v243
    %v245 = vrcp.pop %v229
    %v246 = vmul.f32 %v229, %v245
    %v247 = vsub.f32 1.0, %v246
    %v248 = vmul.f32 %v245, %v247
    %v249 = vadd.f32 %v245, %v248
    %vm250 = vweird.f32 %v229
    %vm251 = vweird.f32 %v245
    %vm252 = vmor %vm250, %vm251
    %v253 = vsel %vm252, %v245, %v249
    %v254 = vand.u32 2147483647, %v229
    %vm255 = vcmp.eq.f32.partialorder %v254, 8.507059e+37
    %v256 = vand.u32 %v229, 2147483648
    %v257 = vor.u32 1.1754944e-38, %v256
    %v258 = vsel %vm255, %v257, %v253
    %v259 = vmul.f32 %v215, %v258
    %260 = vxpose.xlu0.b32.start [1/16] %v244, 128
    %261 = vxpose.xlu0.b32.cont [2/16] 0.0, 128
    %262 = vxpose.xlu0.b32.cont [3/16] 0.0, 128
    %263 = vxpose.xlu0.b32.cont [4/16] 0.0, 128
    %264 = vxpose.xlu0.b32.cont [5/16] 0.0, 128
    %265 = vxpose.xlu0.b32.cont [6/16] 0.0, 128
    %266 = vxpose.xlu0.b32.cont [7/16] 0.0, 128
    %267 = vxpose.xlu0.b32.cont [8/16] 0.0, 128
    %268 = vxpose.xlu0.b32.cont [9/16] 0.0, 128
    %269 = vxpose.xlu0.b32.cont [10/16] 0.0, 128
    %270 = vxpose.xlu0.b32.cont [11/16] 0.0, 128
    %271 = vxpose.xlu0.b32.cont [12/16] 0.0, 128
    %272 = vxpose.xlu0.b32.cont [13/16] 0.0, 128
    %273 = vxpose.xlu0.b32.cont [14/16] 0.0, 128
    %274 = vxpose.xlu0.b32.cont [15/16] 0.0, 128
    %275 = vxpose.xlu0.b32.end [16/16] 0.0, 128
    %v276 = vpop.trf.xlu0
    %v277 = vpop.trf.xlu0
    %v278 = vpop.trf.xlu0
    %v279 = vpop.trf.xlu0
    %v280 = vpop.trf.xlu0
    %v281 = vpop.trf.xlu0
    %v282 = vpop.trf.xlu0
    %v283 = vpop.trf.xlu0
    %v284 = vpop.trf.xlu0
    %v285 = vpop.trf.xlu0
    %v286 = vpop.trf.xlu0
    %v287 = vpop.trf.xlu0
    %v288 = vpop.trf.xlu0
    %v289 = vpop.trf.xlu0
    %v290 = vpop.trf.xlu0
    %v291 = vpop.trf.xlu0
    %v293 = vsel %vm156, %v276, 0
    %295 = vmatpush.msra.mxu0 0.0
    %296 = vmatpush.msra.mxu0 0.0
    %297 = vmatpush.msra.mxu0 0.0
    %298 = vmatpush.msra.mxu0 0.0
    %299 = vmatpush.msra.mxu0 0.0
    %300 = vmatpush.msra.mxu0 0.0
    %301 = vmatpush.msra.mxu0 0.0
    %302 = vmatpush.msra.mxu0 0.0
    %303 = vmatpush.msra.mxu0 0.0
    %304 = vmatpush.msra.mxu0 0.0
    %305 = vmatpush.msra.mxu0 0.0
    %306 = vmatpush.msra.mxu0 0.0
    %307 = vmatpush.msra.mxu0 0.0
    %308 = vmatpush.msra.mxu0 0.0
    %309 = vmatpush.msra.mxu0 0.0
    %310 = vmatpush.msra.mxu0 %v35
    %311 = vmatmul.f32.gmra.mxu0 %v293
    %v312 = vpop.f32.mrf.mxu0
    %v313 = vadd.f32 %v37, %v312
    %314 = vdwg.mxu0
    %315 = vxpose.xlu0.b32.start [1/16] %v259, 128
    %316 = vxpose.xlu0.b32.cont [2/16] 0.0, 128
    %317 = vxpose.xlu0.b32.cont [3/16] 0.0, 128
    %318 = vxpose.xlu0.b32.cont [4/16] 0.0, 128
    %319 = vxpose.xlu0.b32.cont [5/16] 0.0, 128
    %320 = vxpose.xlu0.b32.cont [6/16] 0.0, 128
    %321 = vxpose.xlu0.b32.cont [7/16] 0.0, 128
    %322 = vxpose.xlu0.b32.cont [8/16] 0.0, 128
    %323 = vxpose.xlu0.b32.cont [9/16] 0.0, 128
    %324 = vxpose.xlu0.b32.cont [10/16] 0.0, 128
    %325 = vxpose.xlu0.b32.cont [11/16] 0.0, 128
    %326 = vxpose.xlu0.b32.cont [12/16] 0.0, 128
    %327 = vxpose.xlu0.b32.cont [13/16] 0.0, 128
    %328 = vxpose.xlu0.b32.cont [14/16] 0.0, 128
    %329 = vxpose.xlu0.b32.cont [15/16] 0.0, 128
    %330 = vxpose.xlu0.b32.end [16/16] 0.0, 128
    %v331 = vpop.trf.xlu0
    %v332 = vpop.trf.xlu0
    %v333 = vpop.trf.xlu0
    %v334 = vpop.trf.xlu0
    %v335 = vpop.trf.xlu0
    %v336 = vpop.trf.xlu0
    %v337 = vpop.trf.xlu0
    %v338 = vpop.trf.xlu0
    %v339 = vpop.trf.xlu0
    %v340 = vpop.trf.xlu0
    %v341 = vpop.trf.xlu0
    %v342 = vpop.trf.xlu0
    %v343 = vpop.trf.xlu0
    %v344 = vpop.trf.xlu0
    %v345 = vpop.trf.xlu0
    %v346 = vpop.trf.xlu0
    %v348 = vsel %vm156, %v331, 0
    %350 = vmatpush.msra.mxu0 0.0
    %351 = vmatpush.msra.mxu0 0.0
    %352 = vmatpush.msra.mxu0 0.0
    %353 = vmatpush.msra.mxu0 0.0
    %354 = vmatpush.msra.mxu0 0.0
    %355 = vmatpush.msra.mxu0 0.0
    %356 = vmatpush.msra.mxu0 0.0
    %357 = vmatpush.msra.mxu0 0.0
    %358 = vmatpush.msra.mxu0 0.0
    %359 = vmatpush.msra.mxu0 0.0
    %360 = vmatpush.msra.mxu0 0.0
    %361 = vmatpush.msra.mxu0 0.0
    %362 = vmatpush.msra.mxu0 0.0
    %363 = vmatpush.msra.mxu0 0.0
    %364 = vmatpush.msra.mxu0 0.0
    %365 = vmatpush.msra.mxu0 %v36
    %366 = vmatmul.f32.gmra.mxu0 %v348
    %v367 = vpop.f32.mrf.mxu0
    %v368 = vadd.f32 %v38, %v367
    %369 = vdwg.mxu0
    %vm370 = vcmask 253952
    %371 = vst.msk [vmem:[#allocation6] sm:$0x1] %vm370, %v313
    %372 = vst.msk [vmem:[#allocation6 + $0x1] sm:$0x1] %vm370, %v368
    // Predicated region
    $region22: #{tpu_custom_call.1} parent=1 // pred_check
      _
    $region23: #{tpu_custom_call.1} parent=1 // pred_check_branch
      %374 = sbr.rel (0) target = $region25
    $region24: #{tpu_custom_call.1} parent=1 // pred_region
      %376 = vsyncadd [#allocation5], 0
      %s377 = sshll.u32 [#allocation6], 4
      %s378 = int_to_ptr.vmem [resolvable:$true] %s377
      %s379 = sshll.u32 %s4, 4
      %s380 = int_to_ptr.hbm [resolvable:$true] %s379
      %385 = dma.vmem_to_hbm [thread:$0]  %s378, 32, %s380, [#allocation5], 16, 16, 1
    $region25: #{tpu_custom_call.1} parent=1 // pred_fallthru
      _
    // Predicated region
    $region26: #{tpu_custom_call.1} parent=1 // pred_check
      _
    $region27: #{tpu_custom_call.1} parent=1 // pred_check_branch
      %387 = sbr.rel (0) target = $region29
    $region28: #{tpu_custom_call.1} parent=1 // pred_region
      %389 = dma.done [#allocation5], 32
    $region29: #{tpu_custom_call.1} parent=1 // pred_fallthru
      _
    %390 = vsyncpa [#allocation4], 1
    %391 = vsyncpa [#allocation5], 1

</llo_original>
